<compile_context>
chip_gen: v7x
topology: tpu7x:2x2x1
jax: 0.10.0
libtpu: 0.0.40
codegen_flags: <defaults>
</compile_context>

<pallas_src>
import functools
import numpy as np

import jax
import jax.numpy as jnp
from jax.experimental import pallas as pl
from jax.experimental.pallas import tpu as pltpu


def _round_up(x, m):
    return ((x + m - 1) // m) * m


def _pick_tiles(n):
    """Return (tm, tk, n_pad): MXU-sized tiles, >=2 row tiles when possible."""
    if n >= 512:
        tm = tk = 256          # feed the 2x256x256 MXU on v6e / v7x
    elif n >= 256:
        tm = tk = 128          # keep >= 2 row tiles so both v7x TCs get work
    else:
        n_pad = _round_up(max(n, 8), 8)
        return n_pad, n_pad, n_pad   # single full-array tile (legal: block == array)
    return tm, tk, _round_up(n, tm)


_PARAMS_2D = pltpu.CompilerParams(
    dimension_semantics=("parallel", "arbitrary"),
    vmem_limit_bytes=48 * 1024 * 1024,   # stays under v7x's 64 MiB/TC
)
_PARAMS_1D = pltpu.CompilerParams(
    dimension_semantics=("parallel",),
    vmem_limit_bytes=48 * 1024 * 1024,
)


# --------------------------------------------------------------------------
# Kernels
# --------------------------------------------------------------------------
def _xw_kernel(x_ref, w_ref, o_ref):
    """One row tile of H0 = X @ W_pad (W resident, constant index_map)."""
    o_ref[...] = jnp.dot(x_ref[...], w_ref[...],
                         preferred_element_type=jnp.float32).astype(o_ref.dtype)


def _make_propagate_kernel(tk):
    """Row tile of H_next = S @ H; grid = (row_tiles, k_tiles), axis 1 = reduction.

    H is VMEM-resident (full-array block); the kernel slices the k-th chunk.
    """
    def kernel(s_ref, h_ref, o_ref, acc_ref):
        k = pl.program_id(1)

        @pl.when(k == 0)
        def _():
            acc_ref[...] = jnp.zeros_like(acc_ref)

        start = pl.multiple_of(k * tk, tk)
        acc_ref[...] += jnp.dot(s_ref[...], h_ref[pl.ds(start, tk), :],
                                preferred_element_type=jnp.float32)

        @pl.when(k == pl.num_programs(1) - 1)
        def _():
            o_ref[...] = acc_ref[...].astype(o_ref.dtype)

    return kernel


def _make_head_kernel(tk):
    """Fused: last propagation step + bias + row log_softmax for one row tile."""
    def kernel(s_ref, h_ref, b_ref, o_ref, acc_ref):
        k = pl.program_id(1)

        @pl.when(k == 0)
        def _():
            acc_ref[...] = jnp.zeros_like(acc_ref)

        start = pl.multiple_of(k * tk, tk)
        acc_ref[...] += jnp.dot(s_ref[...], h_ref[pl.ds(start, tk), :],
                                preferred_element_type=jnp.float32)

        @pl.when(k == pl.num_programs(1) - 1)
        def _():
            logits = acc_ref[...] + b_ref[...]           # f32; pad lanes ~ -1e30
            m = jnp.max(logits, axis=-1, keepdims=True)
            z = logits - m
            lse = jnp.log(jnp.sum(jnp.exp(z), axis=-1, keepdims=True))
            o_ref[...] = (z - lse).astype(o_ref.dtype)

    return kernel


# --------------------------------------------------------------------------
# pallas_call wrappers
# --------------------------------------------------------------------------
def pallas_xw(X, W, tm):
    n_pad, f = X.shape
    c_pad = W.shape[1]
    return pl.pallas_call(
        _xw_kernel,
        out_shape=jax.ShapeDtypeStruct((n_pad, c_pad), jnp.bfloat16),
        grid_spec=pltpu.PrefetchScalarGridSpec(
            num_scalar_prefetch=0,
            grid=(n_pad // tm,),
            in_specs=[pl.BlockSpec((tm, f), lambda i: (i, 0)),
                      pl.BlockSpec((f, c_pad), lambda i: (0, 0))],   # W resident
            out_specs=pl.BlockSpec((tm, c_pad), lambda i: (i, 0))),
        compiler_params=_PARAMS_1D,
    )(X, W)


def pallas_propagate(S, H, tm, tk):
    n_pad = S.shape[0]
    c_pad = H.shape[1]
    return pl.pallas_call(
        _make_propagate_kernel(tk),
        out_shape=jax.ShapeDtypeStruct((n_pad, c_pad), jnp.bfloat16),
        grid_spec=pltpu.PrefetchScalarGridSpec(
            num_scalar_prefetch=0,
            grid=(n_pad // tm, n_pad // tk),
            in_specs=[pl.BlockSpec((tm, tk), lambda i, k: (i, k)),
                      # H resident in VMEM: constant index_map -> fetched once
                      pl.BlockSpec((n_pad, c_pad), lambda i, k: (0, 0))],
            out_specs=pl.BlockSpec((tm, c_pad), lambda i, k: (i, 0)),
            scratch_shapes=[pltpu.VMEM((tm, c_pad), jnp.float32)]),
        compiler_params=_PARAMS_2D,
    )(S, H)


def pallas_propagate_head(S, H, b, tm, tk):
    n_pad = S.shape[0]
    c_pad = H.shape[1]
    return pl.pallas_call(
        _make_head_kernel(tk),
        out_shape=jax.ShapeDtypeStruct((n_pad, c_pad), jnp.float32),
        grid_spec=pltpu.PrefetchScalarGridSpec(
            num_scalar_prefetch=0,
            grid=(n_pad // tm, n_pad // tk),
            in_specs=[pl.BlockSpec((tm, tk), lambda i, k: (i, k)),
                      pl.BlockSpec((n_pad, c_pad), lambda i, k: (0, 0)),
                      pl.BlockSpec((1, c_pad), lambda i, k: (0, 0))],
            out_specs=pl.BlockSpec((tm, c_pad), lambda i, k: (i, 0)),
            scratch_shapes=[pltpu.VMEM((tm, c_pad), jnp.float32)]),
        compiler_params=_PARAMS_2D,
    )(S, H, b)


# --------------------------------------------------------------------------
# SGC forward (JAX glue + Pallas kernels)
# --------------------------------------------------------------------------
@functools.partial(jax.jit, static_argnames=("K",))
def sgc_forward(x, edge_index, weight, bias, K=2):
    x = x.astype(jnp.float32)
    n, f = x.shape
    c = weight.shape[1]
    c_pad = _round_up(c, 128)
    tm, tk, n_pad = _pick_tiles(n)

    # glue: dense symmetric-normalized adjacency with self loops (gcn_norm),
    # built directly at the padded size; padded rows/cols stay zero.
    row = edge_index[0].astype(jnp.int32)
    col = edge_index[1].astype(jnp.int32)
    diag = jnp.arange(n, dtype=jnp.int32)
    A = (jnp.zeros((n_pad, n_pad), jnp.float32)
         .at[row, col].add(1.0)
         .at[diag, diag].add(1.0))
    deg = jnp.sum(A, axis=1)
    dinv = jnp.where(deg > 0, jax.lax.rsqrt(deg), 0.0)
    Sp = (dinv[:, None] * A * dinv[None, :]).astype(jnp.bfloat16)

    Xp = jnp.zeros((n_pad, f), jnp.float32).at[:n, :].set(x)
    Wp = jnp.zeros((f, c_pad), jnp.float32).at[:, :c].set(weight.astype(jnp.float32))
    # padded class lanes get a huge-negative bias so log_softmax ignores them
    bp = jnp.full((1, c_pad), -1e30, jnp.float32).at[:, :c].set(
        bias.astype(jnp.float32))

    # algebraic reorder: propagate X @ W (c_pad columns) instead of X (f columns)
    Hp = pallas_xw(Xp, Wp, tm)                        # (n_pad, c_pad) bf16
    for _ in range(K - 1):
        Hp = pallas_propagate(Sp, Hp, tm, tk)         # (n_pad, c_pad) bf16
    out = pallas_propagate_head(Sp, Hp, bp, tm, tk)   # (n_pad, c_pad) f32
    return out[:n, :c]


class SGCPallas:
    """JAX/Pallas port of SGC: SGConv(num_features, num_classes, K=2) + log_softmax."""

    def __init__(self, num_features, num_classes, K=2, key=None):
        self.K = K
        key = jax.random.PRNGKey(0) if key is None else key
        kw, kb = jax.random.split(key)
        bound = 1.0 / np.sqrt(num_features)
        self.weight = jax.random.uniform(
            kw, (num_features, num_classes), jnp.float32, -bound, bound)
        self.bias = jax.random.uniform(
            kb, (1, num_classes), jnp.float32, -bound, bound)

    def forward(self, x, edge_index):
        return sgc_forward(x, edge_index, self.weight, self.bias, K=self.K)


# --------------------------------------------------------------------------
# Pure-numpy reference (faithful port of SGConv(K) + log_softmax)
# --------------------------------------------------------------------------
def reference_forward(x, edge_index, weight, bias, K=2):
    x = np.asarray(x, np.float64)
    n = x.shape[0]
    A = np.zeros((n, n), np.float64)
    for r, c in zip(np.asarray(edge_index[0]), np.asarray(edge_index[1])):
        A[int(r), int(c)] += 1.0
    A += np.eye(n)
    deg = A.sum(axis=1)
    dinv = np.where(deg > 0, 1.0 / np.sqrt(deg), 0.0)
    S = dinv[:, None] * A * dinv[None, :]
    h = x
    for _ in range(K):
        h = S @ h
    logits = h @ np.asarray(weight, np.float64) + np.asarray(bias, np.float64)
    m = logits.max(axis=1, keepdims=True)
    z = logits - m
    lse = np.log(np.exp(z).sum(axis=1, keepdims=True))
    return z - lse


if __name__ == "__main__":
    key = jax.random.PRNGKey(0)
    n_nodes, n_feat, n_classes = 16, 32, 4

    kx, kmodel = jax.random.split(key)
    x = jax.random.normal(kx, (n_nodes, n_feat), dtype=jnp.float32)

    # deterministic small graph: a ring + a few chords, both edge directions
    src, dst = [], []
    for i in range(n_nodes):
        j = (i + 1) % n_nodes
        src += [i, j]
        dst += [j, i]
    for i, j in [(0, 8), (2, 10), (4, 12), (6, 14)]:
        src += [i, j]
        dst += [j, i]
    edge_index = jnp.asarray(np.array([src, dst], dtype=np.int32))

    model = SGCPallas(n_feat, n_classes, K=2, key=kmodel)
    out = jax.block_until_ready(model.forward(x, edge_index))

    ref = reference_forward(np.asarray(x), np.asarray(edge_index),
                            np.asarray(model.weight), np.asarray(model.bias),
                            K=2)
    # bf16 S / H (f32 accumulation) -> relaxed tolerance vs float64 reference
    np.testing.assert_allclose(np.asarray(out), ref, rtol=5e-2, atol=5e-2)

    print("KERNEL_OK")
</pallas_src>

<mosaic_0001>
module attributes {stable_mosaic.version = 11 : i64} {
  func.func private @main(%arg0: i32) attributes {dimension_semantics = [#tpu.dimension_semantics<core_parallel>], iteration_bounds = array<i64: 2>, tpu.core_type = #tpu.core_type<sc_scalar_subcore>, window_params = []} {
    return
  }
}

module attributes {stable_mosaic.version = 11 : i64} {
  func.func private @main(%arg0: i32) attributes {dimension_semantics = [#tpu.dimension_semantics<core_parallel>], iteration_bounds = array<i64: 2>, tpu.core_type = #tpu.core_type<sc_scalar_subcore>, window_params = []} {
    return
  }
}

module attributes {stable_mosaic.version = 11 : i64} {
  func.func @_xw_kernel(%arg0: i32, %arg1: memref<16x32xf32, #tpu.memory_space<vmem>>, %arg2: memref<32x128xf32, #tpu.memory_space<vmem>>, %arg3: memref<16x128xbf16, #tpu.memory_space<vmem>>) attributes {dimension_semantics = [#tpu.dimension_semantics<parallel>], iteration_bounds = array<i64: 1>, scalar_prefetch = 0 : i64, scratch_operands = 0 : i64, tpu.core_type = #tpu.core_type<tc>, window_params = [{transform_indices = @transform_0, window_bounds = array<i64: 16, 32>}, {pipeline_mode = #tpu.pipeline_mode<synchronous>, transform_indices = @transform_1, window_bounds = array<i64: 32, 128>}, {transform_indices = @transform_2, window_bounds = array<i64: 16, 128>}]} {
    %c0 = arith.constant 0 : index
    %c0_0 = arith.constant 0 : index
    %0 = vector.load %arg1[%c0, %c0_0] : memref<16x32xf32, #tpu.memory_space<vmem>>, vector<16x32xf32>
    %c0_1 = arith.constant 0 : index
    %c0_2 = arith.constant 0 : index
    %1 = vector.load %arg2[%c0_1, %c0_2] : memref<32x128xf32, #tpu.memory_space<vmem>>, vector<32x128xf32>
    %cst = arith.constant dense<0.000000e+00> : vector<16x128xf32>
    %2 = tpu.matmul %0, %1, %cst {dimension_numbers = #tpu.dot_dimension_numbers<[1], [0], [0], [1], [0, 0, 1, 1], [], []>} : vector<16x32xf32>, vector<32x128xf32>, vector<16x128xf32> -> vector<16x128xf32>
    %3 = arith.truncf %2 : vector<16x128xf32> to vector<16x128xbf16>
    %c0_3 = arith.constant 0 : index
    %c0_4 = arith.constant 0 : index
    %4 = vector.load %arg3[%c0_3, %c0_4] : memref<16x128xbf16, #tpu.memory_space<vmem>>, vector<16x128xbf16>
    tpu.vector_store %arg3[%c0_3, %c0_4], %3 {strides = array<i32>} : memref<16x128xbf16, #tpu.memory_space<vmem>>, vector<16x128xbf16>,
    return
  }
  func.func @transform_0(%arg0: i32) -> (i32, i32) {
    %c0_i32 = arith.constant 0 : i32
    %c0_i32_0 = arith.constant 0 : i32
    return %arg0, %c0_i32 : i32, i32
  }
  func.func @transform_1(%arg0: i32) -> (i32, i32) {
    %c0_i32 = arith.constant 0 : i32
    %c0_i32_0 = arith.constant 0 : i32
    %c0_i32_1 = arith.constant 0 : i32
    return %c0_i32, %c0_i32_0 : i32, i32
  }
  func.func @transform_2(%arg0: i32) -> (i32, i32) {
    %c0_i32 = arith.constant 0 : i32
    %c0_i32_0 = arith.constant 0 : i32
    return %arg0, %c0_i32 : i32, i32
  }
}

module attributes {stable_mosaic.version = 11 : i64} {
  func.func @kernel(%arg0: i32, %arg1: i32, %arg2: memref<16x16xbf16, #tpu.memory_space<vmem>>, %arg3: memref<16x128xbf16, #tpu.memory_space<vmem>>, %arg4: memref<16x128xbf16, #tpu.memory_space<vmem>>, %arg5: memref<16x128xf32, #tpu.memory_space<vmem>>) attributes {dimension_semantics = [#tpu.dimension_semantics<parallel>, #tpu.dimension_semantics<arbitrary>], iteration_bounds = array<i64: 1, 1>, scalar_prefetch = 0 : i64, scratch_operands = 1 : i64, tpu.core_type = #tpu.core_type<tc>, window_params = [{transform_indices = @transform_0, window_bounds = array<i64: 16, 16>}, {pipeline_mode = #tpu.pipeline_mode<synchronous>, transform_indices = @transform_1, window_bounds = array<i64: 16, 128>}, {transform_indices = @transform_2, window_bounds = array<i64: 16, 128>}]} {
    %c0_i32 = arith.constant 0 : i32
    %0 = arith.cmpi eq, %arg1, %c0_i32 : i32
    %1 = arith.extui %0 : i1 to i32
    %c0_i32_0 = arith.constant 0 : i32
    %2 = arith.cmpi ne, %1, %c0_i32_0 : i32
    scf.if %2 {
      %cst_9 = arith.constant 0.000000e+00 : f32
      %15 = vector.broadcast %cst_9 : f32 to vector<16x128xf32>
      %c0_10 = arith.constant 0 : index
      %c0_11 = arith.constant 0 : index
      %16 = vector.load %arg5[%c0_10, %c0_11] : memref<16x128xf32, #tpu.memory_space<vmem>>, vector<16x128xf32>
      tpu.vector_store %arg5[%c0_10, %c0_11], %15 {strides = array<i32>} : memref<16x128xf32, #tpu.memory_space<vmem>>, vector<16x128xf32>,
    } else {
    }
    %c16_i32 = arith.constant 16 : i32
    %3 = arith.muli %arg1, %c16_i32 : i32
    %4 = tpu.assume_multiple %3, 16 : i32
    %c0 = arith.constant 0 : index
    %c0_1 = arith.constant 0 : index
    %5 = vector.load %arg5[%c0, %c0_1] : memref<16x128xf32, #tpu.memory_space<vmem>>, vector<16x128xf32>
    %c0_2 = arith.constant 0 : index
    %c0_3 = arith.constant 0 : index
    %6 = vector.load %arg2[%c0_2, %c0_3] : memref<16x16xbf16, #tpu.memory_space<vmem>>, vector<16x16xbf16>
    %7 = arith.index_cast %4 : i32 to index
    %c0_4 = arith.constant 0 : index
    %8 = vector.load %arg3[%7, %c0_4] : memref<16x128xbf16, #tpu.memory_space<vmem>>, vector<16x128xbf16>
    %cst = arith.constant dense<0.000000e+00> : vector<16x128xf32>
    %9 = tpu.matmul %6, %8, %cst {dimension_numbers = #tpu.dot_dimension_numbers<[1], [0], [0], [1], [0, 0, 1, 1], [], []>} : vector<16x16xbf16>, vector<16x128xbf16>, vector<16x128xf32> -> vector<16x128xf32>
    %10 = arith.addf %5, %9 : vector<16x128xf32>
    %c0_5 = arith.constant 0 : index
    %c0_6 = arith.constant 0 : index
    %11 = vector.load %arg5[%c0_5, %c0_6] : memref<16x128xf32, #tpu.memory_space<vmem>>, vector<16x128xf32>
    tpu.vector_store %arg5[%c0_5, %c0_6], %10 {strides = array<i32>} : memref<16x128xf32, #tpu.memory_space<vmem>>, vector<16x128xf32>,
    %c0_i32_7 = arith.constant 0 : i32
    %12 = arith.cmpi eq, %arg1, %c0_i32_7 : i32
    %13 = arith.extui %12 : i1 to i32
    %c0_i32_8 = arith.constant 0 : i32
    %14 = arith.cmpi ne, %13, %c0_i32_8 : i32
    scf.if %14 {
      %c0_9 = arith.constant 0 : index
      %c0_10 = arith.constant 0 : index
      %15 = vector.load %arg5[%c0_9, %c0_10] : memref<16x128xf32, #tpu.memory_space<vmem>>, vector<16x128xf32>
      %16 = arith.truncf %15 : vector<16x128xf32> to vector<16x128xbf16>
      %c0_11 = arith.constant 0 : index
      %c0_12 = arith.constant 0 : index
      %17 = vector.load %arg4[%c0_11, %c0_12] : memref<16x128xbf16, #tpu.memory_space<vmem>>, vector<16x128xbf16>
      tpu.vector_store %arg4[%c0_11, %c0_12], %16 {strides = array<i32>} : memref<16x128xbf16, #tpu.memory_space<vmem>>, vector<16x128xbf16>,
    } else {
    }
    return
  }
  func.func @transform_0(%arg0: i32, %arg1: i32) -> (i32, i32) {
    %c0_i32 = arith.constant 0 : i32
    return %arg0, %arg1 : i32, i32
  }
  func.func @transform_1(%arg0: i32, %arg1: i32) -> (i32, i32) {
    %c0_i32 = arith.constant 0 : i32
    %c0_i32_0 = arith.constant 0 : i32
    %c0_i32_1 = arith.constant 0 : i32
    return %c0_i32, %c0_i32_0 : i32, i32
  }
  func.func @transform_2(%arg0: i32, %arg1: i32) -> (i32, i32) {
    %c0_i32 = arith.constant 0 : i32
    %c0_i32_0 = arith.constant 0 : i32
    return %arg0, %c0_i32 : i32, i32
  }
}

module attributes {stable_mosaic.version = 11 : i64} {
  func.func @kernel(%arg0: i32, %arg1: i32, %arg2: memref<16x16xbf16, #tpu.memory_space<vmem>>, %arg3: memref<16x128xbf16, #tpu.memory_space<vmem>>, %arg4: memref<1x128xf32, #tpu.memory_space<vmem>>, %arg5: memref<16x128xf32, #tpu.memory_space<vmem>>, %arg6: memref<16x128xf32, #tpu.memory_space<vmem>>) attributes {dimension_semantics = [#tpu.dimension_semantics<parallel>, #tpu.dimension_semantics<arbitrary>], iteration_bounds = array<i64: 1, 1>, scalar_prefetch = 0 : i64, scratch_operands = 1 : i64, tpu.core_type = #tpu.core_type<tc>, window_params = [{transform_indices = @transform_0, window_bounds = array<i64: 16, 16>}, {pipeline_mode = #tpu.pipeline_mode<synchronous>, transform_indices = @transform_1, window_bounds = array<i64: 16, 128>}, {pipeline_mode = #tpu.pipeline_mode<synchronous>, transform_indices = @transform_2, window_bounds = array<i64: 1, 128>}, {transform_indices = @transform_3, window_bounds = array<i64: 16, 128>}]} {
    %c0_i32 = arith.constant 0 : i32
    %0 = arith.cmpi eq, %arg1, %c0_i32 : i32
    %1 = arith.extui %0 : i1 to i32
    %c0_i32_0 = arith.constant 0 : i32
    %2 = arith.cmpi ne, %1, %c0_i32_0 : i32
    scf.if %2 {
      %cst_9 = arith.constant 0.000000e+00 : f32
      %15 = vector.broadcast %cst_9 : f32 to vector<16x128xf32>
      %c0_10 = arith.constant 0 : index
      %c0_11 = arith.constant 0 : index
      %16 = vector.load %arg6[%c0_10, %c0_11] : memref<16x128xf32, #tpu.memory_space<vmem>>, vector<16x128xf32>
      tpu.vector_store %arg6[%c0_10, %c0_11], %15 {strides = array<i32>} : memref<16x128xf32, #tpu.memory_space<vmem>>, vector<16x128xf32>,
    } else {
    }
    %c16_i32 = arith.constant 16 : i32
    %3 = arith.muli %arg1, %c16_i32 : i32
    %4 = tpu.assume_multiple %3, 16 : i32
    %c0 = arith.constant 0 : index
    %c0_1 = arith.constant 0 : index
    %5 = vector.load %arg6[%c0, %c0_1] : memref<16x128xf32, #tpu.memory_space<vmem>>, vector<16x128xf32>
    %c0_2 = arith.constant 0 : index
    %c0_3 = arith.constant 0 : index
    %6 = vector.load %arg2[%c0_2, %c0_3] : memref<16x16xbf16, #tpu.memory_space<vmem>>, vector<16x16xbf16>
    %7 = arith.index_cast %4 : i32 to index
    %c0_4 = arith.constant 0 : index
    %8 = vector.load %arg3[%7, %c0_4] : memref<16x128xbf16, #tpu.memory_space<vmem>>, vector<16x128xbf16>
    %cst = arith.constant dense<0.000000e+00> : vector<16x128xf32>
    %9 = tpu.matmul %6, %8, %cst {dimension_numbers = #tpu.dot_dimension_numbers<[1], [0], [0], [1], [0, 0, 1, 1], [], []>} : vector<16x16xbf16>, vector<16x128xbf16>, vector<16x128xf32> -> vector<16x128xf32>
    %10 = arith.addf %5, %9 : vector<16x128xf32>
    %c0_5 = arith.constant 0 : index
    %c0_6 = arith.constant 0 : index
    %11 = vector.load %arg6[%c0_5, %c0_6] : memref<16x128xf32, #tpu.memory_space<vmem>>, vector<16x128xf32>
    tpu.vector_store %arg6[%c0_5, %c0_6], %10 {strides = array<i32>} : memref<16x128xf32, #tpu.memory_space<vmem>>, vector<16x128xf32>,
    %c0_i32_7 = arith.constant 0 : i32
    %12 = arith.cmpi eq, %arg1, %c0_i32_7 : i32
    %13 = arith.extui %12 : i1 to i32
    %c0_i32_8 = arith.constant 0 : i32
    %14 = arith.cmpi ne, %13, %c0_i32_8 : i32
    scf.if %14 {
      %c0_9 = arith.constant 0 : index
      %c0_10 = arith.constant 0 : index
      %15 = vector.load %arg6[%c0_9, %c0_10] : memref<16x128xf32, #tpu.memory_space<vmem>>, vector<16x128xf32>
      %c0_11 = arith.constant 0 : index
      %c0_12 = arith.constant 0 : index
      %16 = vector.load %arg4[%c0_11, %c0_12] : memref<1x128xf32, #tpu.memory_space<vmem>>, vector<1x128xf32>
      %17 = vector.broadcast %16 : vector<1x128xf32> to vector<16x128xf32>
      %18 = arith.addf %15, %17 : vector<16x128xf32>
      %cst_13 = arith.constant dense<0xFF800000> : vector<16xf32>
      %19 = vector.multi_reduction <maximumf>, %18, %cst_13 [1] : vector<16x128xf32> to vector<16xf32>
      %20 = vector.shape_cast %19 : vector<16xf32> to vector<16x1xf32>
      %21 = vector.broadcast %20 : vector<16x1xf32> to vector<16x128xf32>
      %22 = arith.subf %18, %21 : vector<16x128xf32>
      %23 = math.exp %22 : vector<16x128xf32>
      %cst_14 = arith.constant dense<0.000000e+00> : vector<16xf32>
      %24 = vector.multi_reduction <add>, %23, %cst_14 [1] : vector<16x128xf32> to vector<16xf32>
      %25 = vector.shape_cast %24 : vector<16xf32> to vector<16x1xf32>
      %26 = math.log %25 : vector<16x1xf32>
      %27 = vector.broadcast %26 : vector<16x1xf32> to vector<16x128xf32>
      %28 = arith.subf %22, %27 : vector<16x128xf32>
      %c0_15 = arith.constant 0 : index
      %c0_16 = arith.constant 0 : index
      %29 = vector.load %arg5[%c0_15, %c0_16] : memref<16x128xf32, #tpu.memory_space<vmem>>, vector<16x128xf32>
      tpu.vector_store %arg5[%c0_15, %c0_16], %28 {strides = array<i32>} : memref<16x128xf32, #tpu.memory_space<vmem>>, vector<16x128xf32>,
    } else {
    }
    return
  }
  func.func @transform_0(%arg0: i32, %arg1: i32) -> (i32, i32) {
    %c0_i32 = arith.constant 0 : i32
    return %arg0, %arg1 : i32, i32
  }
  func.func @transform_1(%arg0: i32, %arg1: i32) -> (i32, i32) {
    %c0_i32 = arith.constant 0 : i32
    %c0_i32_0 = arith.constant 0 : i32
    %c0_i32_1 = arith.constant 0 : i32
    return %c0_i32, %c0_i32_0 : i32, i32
  }
  func.func @transform_2(%arg0: i32, %arg1: i32) -> (i32, i32) {
    %c0_i32 = arith.constant 0 : i32
    %c0_i32_0 = arith.constant 0 : i32
    %c0_i32_1 = arith.constant 0 : i32
    return %c0_i32, %c0_i32_0 : i32, i32
  }
  func.func @transform_3(%arg0: i32, %arg1: i32) -> (i32, i32) {
    %c0_i32 = arith.constant 0 : i32
    %c0_i32_0 = arith.constant 0 : i32
    return %arg0, %c0_i32 : i32, i32
  }
}

</mosaic_0001>

<llo_original>
// kernel: sgc_forward.3
$region0: #{sgc_forward.3}
  #allocation0 [shape = 'u32[]', space=smem, size = 0x4, offset = 0x4, fixed_abs, tag = 'smem constant byte address 0x4 - core index']
  #allocation1 [shape = 'u32[144,128]{1,0:T(1,128)}', space=vmem, size = 0x12000, scoped, tag = 'internal scratch']
  %s0 = inlined_call_operand.vmem [shape: f32[16,32], index: 0, kind: input, shape index: {}]
  %s1 = inlined_call_operand.vmem [shape: f32[32,128], index: 1, kind: input, shape index: {}]
  %s2 = inlined_call_operand.vmem [shape: bf16[16,128], index: 2, kind: output, shape index: {}]
  %s3 = sld [smem:[#allocation0]]
  $region18: #{sgc_forward.3} parent=0
    _
  %s5 = ssub.s32 1, %s3
  %s6 = scalar_select 0, %s5, %s3
  // Predicated region
  $region2: #{sgc_forward.3} parent=0 // pred_check
    _
  $region3: #{sgc_forward.3} parent=0 // pred_check_branch
    %8 = sbr.rel (0) target = $region5
  $region4: #{sgc_forward.3} parent=0 // pred_region
    _
  $region5: #{sgc_forward.3} parent=0 // pred_fallthru
    _
  // Predicated region
  $region6: #{sgc_forward.3} parent=0 // pred_check
    _
  $region7: #{sgc_forward.3} parent=0 // pred_check_branch
    %10 = sbr.rel (0) target = $region9
  $region8: #{sgc_forward.3} parent=0 // pred_region
    _
  $region9: #{sgc_forward.3} parent=0 // pred_fallthru
    _
  %v11 = vld [vmem:[%s0] sm:$0xff]
  %v12 = vld [vmem:[%s0 + $0x8] sm:$0xff]
  %v13 = vld [vmem:[%s1] sm:$0xff]
  %v14 = vld [vmem:[%s1 + $0x8] sm:$0xff]
  %v15 = vld [vmem:[%s1 + $0x10] sm:$0xff]
  %v16 = vld [vmem:[%s1 + $0x18] sm:$0xff]
  %vm17 = vcmask 261120
  %v19 = vsel %vm17, %v11, 0
  %v22 = vsel %vm17, %v12, 0
  %24 = vmatprep.subr.mxu0 0.0
  %25 = vmatpush1.msra.mxu0 %v13
  %26 = vmatprep.subr.mxu0 0.0
  %27 = vmatpush1.msra.mxu0 %v14
  %28 = vmatprep.subr.mxu0 0.0
  %29 = vmatpush1.msra.mxu0 %v15
  %30 = vmatprep.subr.mxu0 0.0
  %31 = vmatpush1.msra.mxu0 %v16
  %32 = vmatprep.subr.mxu0 0.0
  %33 = vmatpush1.msra.mxu0 0.0
  %34 = vmatprep.subr.mxu0 0.0
  %35 = vmatpush1.msra.mxu0 0.0
  %36 = vmatprep.subr.mxu0 0.0
  %37 = vmatpush1.msra.mxu0 0.0
  %38 = vmatprep.subr.mxu0 0.0
  %39 = vmatpush1.msra.mxu0 0.0
  %40 = vmatprep.subr.mxu0 0.0
  %41 = vmatpush1.msra.mxu0 0.0
  %42 = vmatprep.subr.mxu0 0.0
  %43 = vmatpush1.msra.mxu0 0.0
  %44 = vmatprep.subr.mxu0 0.0
  %45 = vmatpush1.msra.mxu0 0.0
  %46 = vmatprep.subr.mxu0 0.0
  %47 = vmatpush1.msra.mxu0 0.0
  %48 = vmatprep.subr.mxu0 0.0
  %49 = vmatpush1.msra.mxu0 0.0
  %50 = vmatprep.subr.mxu0 0.0
  %51 = vmatpush1.msra.mxu0 0.0
  %52 = vmatprep.subr.mxu0 0.0
  %53 = vmatpush1.msra.mxu0 0.0
  %54 = vmatprep.subr.mxu0 0.0
  %55 = vmatpush1.msra.mxu0 0.0
  %56 = vmatprep.subr.mxu0 0.0
  %57 = vmatpush1.msra.mxu0 0.0
  %58 = vmatprep.subr.mxu0 0.0
  %59 = vmatpush1.msra.mxu0 0.0
  %60 = vmatprep.subr.mxu0 0.0
  %61 = vmatpush1.msra.mxu0 0.0
  %62 = vmatprep.subr.mxu0 0.0
  %63 = vmatpush1.msra.mxu0 0.0
  %64 = vmatprep.subr.mxu0 0.0
  %65 = vmatpush1.msra.mxu0 0.0
  %66 = vmatprep.subr.mxu0 0.0
  %67 = vmatpush1.msra.mxu0 0.0
  %68 = vmatprep.subr.mxu0 0.0
  %69 = vmatpush1.msra.mxu0 0.0
  %70 = vmatprep.subr.mxu0 0.0
  %71 = vmatpush1.msra.mxu0 0.0
  %72 = vmatprep.subr.mxu0 0.0
  %73 = vmatpush1.msra.mxu0 0.0
  %74 = vmatprep.subr.mxu0 0.0
  %75 = vmatpush1.msra.mxu0 0.0
  %76 = vmatprep.subr.mxu0 0.0
  %77 = vmatpush1.msra.mxu0 0.0
  %78 = vmatprep.subr.mxu0 0.0
  %79 = vmatpush1.msra.mxu0 0.0
  %80 = vmatprep.subr.mxu0 0.0
  %81 = vmatpush1.msra.mxu0 0.0
  %82 = vmatprep.subr.mxu0 0.0
  %83 = vmatpush1.msra.mxu0 0.0
  %84 = vmatprep.subr.mxu0 0.0
  %85 = vmatpush1.msra.mxu0 0.0
  %86 = vmatprep.subr.mxu0 0.0
  %87 = vmatpush1.msra.mxu0 0.0
  %88 = vmatprep.mubr.f32.mxu0 0.0
  %89 = vmatmul.mubr.f32.gmra.mrb[0].mxu0 %v19
  %v90 = vpop.f32.mrb[0].mxu0
  %v91 = vadd.f32 0.0, %v90
  %v92 = vpop.f32.mrb[0].mxu0
  %93 = vmatprep.mubr.f32.mxu0 0.0
  %94 = vmatmul.mubr.f32.gmra.mrb[0].mxu0 %v22
  %v95 = vpop.f32.mrb[0].mxu0
  %v96 = vadd.f32 0.0, %v95
  %v97 = vpop.f32.mrb[0].mxu0
  %98 = vdwg.mxu0
  %v99 = vpack.c.bf16 %v96, %v91
  %v101 = vunpack.c.l.b16 %v99
  %v102 = vunpack.c.h.b16 %v99
  %v103 = vpack.c.b16 %v101, %v101
  %v104 = vpack.c.b16 %v102, %v102
  %107 = vst [vmem:[%s2] sm:$0xf] %v103
  %108 = vst [vmem:[%s2 + $0x4] sm:$0xf] %v104
  // Predicated region
  $region10: #{sgc_forward.3} parent=0 // pred_check
    _
  $region11: #{sgc_forward.3} parent=0 // pred_check_branch
    %110 = sbr.rel (0) target = $region13
  $region12: #{sgc_forward.3} parent=0 // pred_region
    _
  $region13: #{sgc_forward.3} parent=0 // pred_fallthru
    _
  // Predicated region
  $region14: #{sgc_forward.3} parent=0 // pred_check
    _
  $region15: #{sgc_forward.3} parent=0 // pred_check_branch
    %112 = sbr.rel (0) target = $region17
  $region16: #{sgc_forward.3} parent=0 // pred_region
    _
  $region17: #{sgc_forward.3} parent=0 // pred_fallthru
    _

// kernel: sgc_forward.4
$region0: #{sgc_forward.4}
  #allocation0 [shape = 'u32[]', space=smem, size = 0x4, offset = 0x4, fixed_abs, tag = 'smem constant byte address 0x4 - core index']
  #allocation1 [shape = 'u32[144,128]{1,0:T(1,128)}', space=vmem, size = 0x12000, scoped, tag = 'internal scratch']
  #allocation2 [shape = 'f32[16,128]{1,0:T(8,128)}', space=vmem, size = 0x2000, scoped, tag = 'scratch operand']
  %s0 = inlined_call_operand.vmem [shape: bf16[16,16], index: 0, kind: input, shape index: {}]
  %s1 = inlined_call_operand.vmem [shape: bf16[16,128], index: 1, kind: input, shape index: {}]
  %s2 = inlined_call_operand.vmem [shape: bf16[16,128], index: 2, kind: output, shape index: {}]
  %s3 = sld [smem:[#allocation0]]
  $region26: #{sgc_forward.4} parent=0
    _
  %s5 = ssub.s32 1, %s3
  %s6 = scalar_select 0, %s5, %s3
  // Predicated region
  $region2: #{sgc_forward.4} parent=0 // pred_check
    _
  $region3: #{sgc_forward.4} parent=0 // pred_check_branch
    %8 = sbr.rel (0) target = $region5
  $region4: #{sgc_forward.4} parent=0 // pred_region
    _
  $region5: #{sgc_forward.4} parent=0 // pred_fallthru
    _
  // Predicated region
  $region6: #{sgc_forward.4} parent=0 // pred_check
    _
  $region7: #{sgc_forward.4} parent=0 // pred_check_branch
    %10 = sbr.rel (0) target = $region9
  $region8: #{sgc_forward.4} parent=0 // pred_region
    _
  $region9: #{sgc_forward.4} parent=0 // pred_fallthru
    _
  %p12 = scmp.eq.s32.totalorder 0, 0
  // Predicated region
  $region10: #{sgc_forward.4} parent=0 // pred_check
    %p13 = pneg %p12
  $region11: #{sgc_forward.4} parent=0 // pred_check_branch
    %15 = sbr.rel (%p13) target = $region13
  $region12: #{sgc_forward.4} parent=0 // pred_region
    %16 = vst [vmem:[#allocation2] sm:$0xff] 0.0
    %17 = vst [vmem:[#allocation2 + $0x8] sm:$0xff] 0.0
  $region13: #{sgc_forward.4} parent=0 // pred_fallthru
    _
  %s18 = smul.u32 0, 16
  %v19 = vld [vmem:[#allocation2] sm:$0xff]
  %v20 = vld [vmem:[#allocation2 + $0x8] sm:$0xff]
  %v21 = vld [vmem:[%s0] sm:$0xf]
  %v22 = vld [vmem:[%s0 + $0x4] sm:$0xf]
  %s23 = sshra.s32 %s18, 3
  %s24 = sand.u32 %s18, 7
  %s25 = smul.addr %s23, 4
  %s26 = scalar_lea.vmem %s1, %s25
  %v27 = vld [vmem:[%s26] sm:$0xf]
  %v28 = vld [vmem:[%s26 + $0x4] sm:$0xf]
  %v31 = vunpack.c.l.b16 %v21
  %v32 = vunpack.c.l.b16 %v22
  %v33 = vpack.c.b16 %v32, %v31
  %v36 = vunpack.c.l.b16 %v27
  %v37 = vunpack.c.l.b16 %v28
  %v38 = vpack.c.b16 %v37, %v36
  %vm40 = vcmask 130048
  %v42 = vsel %vm40, %v33, 0
  %44 = vmatprep.subr.bf16.mxu0 0
  %45 = vmatpush1.bf16.msra.mxu0 %v38
  %46 = vmatprep.subr.bf16.mxu0 0
  %47 = vmatpush1.bf16.msra.mxu0 0
  %48 = vmatprep.subr.bf16.mxu0 0
  %49 = vmatpush1.bf16.msra.mxu0 0
  %50 = vmatprep.subr.bf16.mxu0 0
  %51 = vmatpush1.bf16.msra.mxu0 0
  %52 = vmatprep.subr.bf16.mxu0 0
  %53 = vmatpush1.bf16.msra.mxu0 0
  %54 = vmatprep.subr.bf16.mxu0 0
  %55 = vmatpush1.bf16.msra.mxu0 0
  %56 = vmatprep.subr.bf16.mxu0 0
  %57 = vmatpush1.bf16.msra.mxu0 0
  %58 = vmatprep.subr.bf16.mxu0 0
  %59 = vmatpush1.bf16.msra.mxu0 0
  %60 = vmatprep.subr.bf16.mxu0 0
  %61 = vmatpush1.bf16.msra.mxu0 0
  %62 = vmatprep.subr.bf16.mxu0 0
  %63 = vmatpush1.bf16.msra.mxu0 0
  %64 = vmatprep.subr.bf16.mxu0 0
  %65 = vmatpush1.bf16.msra.mxu0 0
  %66 = vmatprep.subr.bf16.mxu0 0
  %67 = vmatpush1.bf16.msra.mxu0 0
  %68 = vmatprep.subr.bf16.mxu0 0
  %69 = vmatpush1.bf16.msra.mxu0 0
  %70 = vmatprep.subr.bf16.mxu0 0
  %71 = vmatpush1.bf16.msra.mxu0 0
  %72 = vmatprep.subr.bf16.mxu0 0
  %73 = vmatpush1.bf16.msra.mxu0 0
  %74 = vmatprep.subr.bf16.mxu0 0
  %75 = vmatpush1.bf16.msra.mxu0 0
  %76 = vmatprep.mubr.bf16.mxu0 0
  %77 = vmatmul.mubr.bf16.gmra.mrb[0].mxu0 %v42
  %v78 = vpop.f32.mrb[0].mxu0
  %v79 = vadd.f32 0.0, %v78
  %v80 = vpop.f32.mrb[0].mxu0
  %v81 = vpop.f32.mrb[0].mxu0
  %v82 = vadd.f32 0.0, %v81
  %v83 = vpop.f32.mrb[0].mxu0
  %84 = vdwg.mxu0
  %v85 = vadd.f32 %v19, %v79
  %v86 = vadd.f32 %v20, %v82
  %87 = vst [vmem:[#allocation2] sm:$0xff] %v85
  %88 = vst [vmem:[#allocation2 + $0x8] sm:$0xff] %v86
  // Predicated region
  $region14: #{sgc_forward.4} parent=0 // pred_check
    %p89 = pneg %p12
  $region15: #{sgc_forward.4} parent=0 // pred_check_branch
    %91 = sbr.rel (%p89) target = $region17
  $region16: #{sgc_forward.4} parent=0 // pred_region
    %v92 = vld [vmem:[#allocation2] sm:$0xff]
    %v93 = vld [vmem:[#allocation2 + $0x8] sm:$0xff]
    %v94 = vpack.c.bf16 %v93, %v92
    %v96 = vunpack.c.l.b16 %v94
    %v97 = vunpack.c.h.b16 %v94
    %v98 = vpack.c.b16 %v96, %v96
    %v99 = vpack.c.b16 %v97, %v97
    %102 = vst [vmem:[%s2] sm:$0xf] %v98
    %103 = vst [vmem:[%s2 + $0x4] sm:$0xf] %v99
  $region17: #{sgc_forward.4} parent=0 // pred_fallthru
    _
  // Predicated region
  $region18: #{sgc_forward.4} parent=0 // pred_check
    _
  $region19: #{sgc_forward.4} parent=0 // pred_check_branch
    %105 = sbr.rel (0) target = $region21
  $region20: #{sgc_forward.4} parent=0 // pred_region
    _
  $region21: #{sgc_forward.4} parent=0 // pred_fallthru
    _
  // Predicated region
  $region22: #{sgc_forward.4} parent=0 // pred_check
    _
  $region23: #{sgc_forward.4} parent=0 // pred_check_branch
    %107 = sbr.rel (0) target = $region25
  $region24: #{sgc_forward.4} parent=0 // pred_region
    _
  $region25: #{sgc_forward.4} parent=0 // pred_fallthru
    _

// kernel: sgc_forward.5
$region0: #{sgc_forward.5}
  #allocation0 [shape = 'u32[]', space=smem, size = 0x4, offset = 0x4, fixed_abs, tag = 'smem constant byte address 0x4 - core index']
  #allocation1 [shape = 'u32[144,128]{1,0:T(1,128)}', space=vmem, size = 0x12000, scoped, tag = 'internal scratch']
  #allocation2 [shape = 'f32[16,128]{1,0:T(8,128)}', space=vmem, size = 0x2000, scoped, tag = 'scratch operand']
  %s0 = inlined_call_operand.vmem [shape: bf16[16,16], index: 0, kind: input, shape index: {}]
  %s1 = inlined_call_operand.vmem [shape: bf16[16,128], index: 1, kind: input, shape index: {}]
  %s2 = inlined_call_operand.vmem [shape: f32[1,128], index: 2, kind: input, shape index: {}]
  %s3 = inlined_call_operand.vmem [shape: f32[16,128], index: 3, kind: output, shape index: {}]
  %s4 = sld [smem:[#allocation0]]
  $region30: #{sgc_forward.5} parent=0
    _
  %s6 = ssub.s32 1, %s4
  %s7 = scalar_select 0, %s6, %s4
  // Predicated region
  $region2: #{sgc_forward.5} parent=0 // pred_check
    _
  $region3: #{sgc_forward.5} parent=0 // pred_check_branch
    %9 = sbr.rel (0) target = $region5
  $region4: #{sgc_forward.5} parent=0 // pred_region
    _
  $region5: #{sgc_forward.5} parent=0 // pred_fallthru
    _
  // Predicated region
  $region6: #{sgc_forward.5} parent=0 // pred_check
    _
  $region7: #{sgc_forward.5} parent=0 // pred_check_branch
    %11 = sbr.rel (0) target = $region9
  $region8: #{sgc_forward.5} parent=0 // pred_region
    _
  $region9: #{sgc_forward.5} parent=0 // pred_fallthru
    _
  // Predicated region
  $region10: #{sgc_forward.5} parent=0 // pred_check
    _
  $region11: #{sgc_forward.5} parent=0 // pred_check_branch
    %13 = sbr.rel (0) target = $region13
  $region12: #{sgc_forward.5} parent=0 // pred_region
    _
  $region13: #{sgc_forward.5} parent=0 // pred_fallthru
    _
  %p15 = scmp.eq.s32.totalorder 0, 0
  // Predicated region
  $region14: #{sgc_forward.5} parent=0 // pred_check
    %p16 = pneg %p15
  $region15: #{sgc_forward.5} parent=0 // pred_check_branch
    %18 = sbr.rel (%p16) target = $region17
  $region16: #{sgc_forward.5} parent=0 // pred_region
    %19 = vst [vmem:[#allocation2] sm:$0xff] 0.0
    %20 = vst [vmem:[#allocation2 + $0x8] sm:$0xff] 0.0
  $region17: #{sgc_forward.5} parent=0 // pred_fallthru
    _
  %s21 = smul.u32 0, 16
  %v22 = vld [vmem:[#allocation2] sm:$0xff]
  %v23 = vld [vmem:[#allocation2 + $0x8] sm:$0xff]
  %v24 = vld [vmem:[%s0] sm:$0xf]
  %v25 = vld [vmem:[%s0 + $0x4] sm:$0xf]
  %s26 = sshra.s32 %s21, 3
  %s27 = sand.u32 %s21, 7
  %s28 = smul.addr %s26, 4
  %s29 = scalar_lea.vmem %s1, %s28
  %v30 = vld [vmem:[%s29] sm:$0xf]
  %v31 = vld [vmem:[%s29 + $0x4] sm:$0xf]
  %v34 = vunpack.c.l.b16 %v24
  %v35 = vunpack.c.l.b16 %v25
  %v36 = vpack.c.b16 %v35, %v34
  %v39 = vunpack.c.l.b16 %v30
  %v40 = vunpack.c.l.b16 %v31
  %v41 = vpack.c.b16 %v40, %v39
  %vm43 = vcmask 130048
  %v45 = vsel %vm43, %v36, 0
  %47 = vmatprep.subr.bf16.mxu0 0
  %48 = vmatpush1.bf16.msra.mxu0 %v41
  %49 = vmatprep.subr.bf16.mxu0 0
  %50 = vmatpush1.bf16.msra.mxu0 0
  %51 = vmatprep.subr.bf16.mxu0 0
  %52 = vmatpush1.bf16.msra.mxu0 0
  %53 = vmatprep.subr.bf16.mxu0 0
  %54 = vmatpush1.bf16.msra.mxu0 0
  %55 = vmatprep.subr.bf16.mxu0 0
  %56 = vmatpush1.bf16.msra.mxu0 0
  %57 = vmatprep.subr.bf16.mxu0 0
  %58 = vmatpush1.bf16.msra.mxu0 0
  %59 = vmatprep.subr.bf16.mxu0 0
  %60 = vmatpush1.bf16.msra.mxu0 0
  %61 = vmatprep.subr.bf16.mxu0 0
  %62 = vmatpush1.bf16.msra.mxu0 0
  %63 = vmatprep.subr.bf16.mxu0 0
  %64 = vmatpush1.bf16.msra.mxu0 0
  %65 = vmatprep.subr.bf16.mxu0 0
  %66 = vmatpush1.bf16.msra.mxu0 0
  %67 = vmatprep.subr.bf16.mxu0 0
  %68 = vmatpush1.bf16.msra.mxu0 0
  %69 = vmatprep.subr.bf16.mxu0 0
  %70 = vmatpush1.bf16.msra.mxu0 0
  %71 = vmatprep.subr.bf16.mxu0 0
  %72 = vmatpush1.bf16.msra.mxu0 0
  %73 = vmatprep.subr.bf16.mxu0 0
  %74 = vmatpush1.bf16.msra.mxu0 0
  %75 = vmatprep.subr.bf16.mxu0 0
  %76 = vmatpush1.bf16.msra.mxu0 0
  %77 = vmatprep.subr.bf16.mxu0 0
  %78 = vmatpush1.bf16.msra.mxu0 0
  %79 = vmatprep.mubr.bf16.mxu0 0
  %80 = vmatmul.mubr.bf16.gmra.mrb[0].mxu0 %v45
  %v81 = vpop.f32.mrb[0].mxu0
  %v82 = vadd.f32 0.0, %v81
  %v83 = vpop.f32.mrb[0].mxu0
  %v84 = vpop.f32.mrb[0].mxu0
  %v85 = vadd.f32 0.0, %v84
  %v86 = vpop.f32.mrb[0].mxu0
  %87 = vdwg.mxu0
  %v88 = vadd.f32 %v22, %v82
  %v89 = vadd.f32 %v23, %v85
  %90 = vst [vmem:[#allocation2] sm:$0xff] %v88
  %91 = vst [vmem:[#allocation2 + $0x8] sm:$0xff] %v89
  // Predicated region
  $region18: #{sgc_forward.5} parent=0 // pred_check
    %p92 = pneg %p15
  $region19: #{sgc_forward.5} parent=0 // pred_check_branch
    %94 = sbr.rel (%p92) target = $region21
  $region20: #{sgc_forward.5} parent=0 // pred_region
    %v95 = vld [vmem:[#allocation2] sm:$0xff]
    %v96 = vld [vmem:[#allocation2 + $0x8] sm:$0xff]
    %v97 = vld [vmem:[%s2] sm:$0x1]
    %v99 = vlaneseq
    %v100 = vshrl.u32 %v99, 7
    %v101 = vsub.s32 0, %v100
    %v102 = vrot.slane %v97, %v101
    %v104 = vadd.f32 %v95, %v102
    %v105 = vadd.f32 %v96, %v102
    %106 = vmax.xlane.f32.xlu0 %v104
    %v107 = vpop.xlane.xlu0 %106
    %108 = vmax.xlane.f32.xlu0 %v105
    %v109 = vpop.xlane.xlu0 %108
    %v110 = vsub.f32 %v104, %v107
    %v111 = vsub.f32 %v105, %v109
    %v112 = vmul.f32 %v110, 1.442695
    %v113 = vpow.pop %v112
    %v114 = vmul.f32 %v111, 1.442695
    %v115 = vpow.pop %v114
    %116 = vadd.xlane.f32.xlu0 %v113
    %v117 = vpop.xlane.xlu0 %116
    %118 = vadd.xlane.f32.xlu0 %v115
    %v119 = vpop.xlane.xlu0 %118
    %v120 = vlog2.pop %v117
    %v121 = vmul.f32 %v120, 0.6931472
    %v122 = vlog2.pop %v119
    %v123 = vmul.f32 %v122, 0.6931472
    %v124 = vsub.f32 %v110, %v121
    %v125 = vsub.f32 %v111, %v123
    %126 = vst [vmem:[%s3] sm:$0xff] %v124
    %127 = vst [vmem:[%s3 + $0x8] sm:$0xff] %v125
  $region21: #{sgc_forward.5} parent=0 // pred_fallthru
    _
  // Predicated region
  $region22: #{sgc_forward.5} parent=0 // pred_check
    _
  $region23: #{sgc_forward.5} parent=0 // pred_check_branch
    %129 = sbr.rel (0) target = $region25
  $region24: #{sgc_forward.5} parent=0 // pred_region
    _
  $region25: #{sgc_forward.5} parent=0 // pred_fallthru
    _
  // Predicated region
  $region26: #{sgc_forward.5} parent=0 // pred_check
    _
  $region27: #{sgc_forward.5} parent=0 // pred_check_branch
    %131 = sbr.rel (0) target = $region29
  $region28: #{sgc_forward.5} parent=0 // pred_region
    _
  $region29: #{sgc_forward.5} parent=0 // pred_fallthru
    _

</llo_original>
